<compile_context>
chip_gen: v6e
topology: v6e:2x2x1
jax: 0.10.0
libtpu: 0.0.40
codegen_flags: <defaults>
</compile_context>

<pallas_src>
import jax
import jax.numpy as jnp
from jax.experimental import pallas as pl
from jax.experimental.pallas import tpu as pltpu

VOCAB_SIZE = 65
N_EMBED = 32
BLOCK_SIZE = 8   # max sequence length (position table rows)
V_PAD = 128      # lane-dense padded vocab dimension


def bigram_kernel(idx_ref, tok_tab_ref, w_ref, pos_bias_ref, out_ref):
    # idx_ref:      (BT, 1)      int32, pre-flattened row-major (row = b*T + t)
    # tok_tab_ref:  (V_PAD, C)   f32, zero-padded token embedding table
    # w_ref:        (C, V_PAD)   f32, lm_head weight pre-transposed & lane-padded
    # pos_bias_ref: (BT, V_PAD)  f32, (pos_table @ W^T + bias) tiled over batch
    # out_ref:      (BT, V_PAD)  f32
    BT = idx_ref.shape[0]
    Vp, _ = tok_tab_ref.shape

    # Token embedding gather expressed as a one-hot matmul (exact in f32, MXU).
    tok_oh = (idx_ref[...] ==
              jax.lax.broadcasted_iota(jnp.int32, (BT, Vp), 1)).astype(jnp.float32)
    tok_emb = jnp.dot(tok_oh, tok_tab_ref[...],
                      preferred_element_type=jnp.float32)        # (BT, C)

    # lm_head matmul; position embedding + bias already folded into pos_bias.
    logits = jnp.dot(tok_emb, w_ref[...],
                     preferred_element_type=jnp.float32)         # (BT, V_PAD)
    out_ref[...] = logits + pos_bias_ref[...]

    # TODO(synk): cross-entropy loss path (target is not None) not implemented;
    # this kernel covers the target=None forward (loss = None).


def bigram_forward(idx, tok_table, pos_table, w, bias):
    """idx (B, T) int32; tok_table (V, C); pos_table (P, C); w (V, C); bias (V,).

    Returns (logits (B, T, V) float32, None) — matches BigramLM.forward(idx)."""
    B, T = idx.shape
    V, C = tok_table.shape
    BT = B * T

    # ---- layout plumbing in the wrapper (one-off, keeps the kernel lane-dense) ----
    tok_pad = jnp.zeros((V_PAD, C), jnp.float32).at[:V].set(tok_table)
    w_t_pad = jnp.zeros((C, V_PAD), jnp.float32).at[:, :V].set(w.T)
    b_pad = jnp.zeros((V_PAD,), jnp.float32).at[:V].set(bias)
    # Fold position embedding + bias: pos_bias[t] = pos_table[t] @ W^T + b.
    pos_bias = pos_table[:T] @ w_t_pad + b_pad                     # (T, V_PAD)
    pos_bias = jnp.tile(pos_bias, (B, 1))                          # (BT, V_PAD)
    idx_flat = idx.reshape(BT, 1).astype(jnp.int32)                # flatten outside

    out_pad = pl.pallas_call(
        bigram_kernel,
        grid=(1,),
        in_specs=[
            pl.BlockSpec((BT, 1), lambda i: (0, 0)),
            pl.BlockSpec((V_PAD, C), lambda i: (0, 0)),
            pl.BlockSpec((C, V_PAD), lambda i: (0, 0)),
            pl.BlockSpec((BT, V_PAD), lambda i: (0, 0)),
        ],
        out_specs=pl.BlockSpec((BT, V_PAD), lambda i: (0, 0)),
        out_shape=jax.ShapeDtypeStruct((BT, V_PAD), jnp.float32),
        compiler_params=pltpu.CompilerParams(
            dimension_semantics=("parallel",)),
    )(idx_flat, tok_pad, w_t_pad, pos_bias)

    return out_pad[:, :V].reshape(B, T, V), None


if __name__ == "__main__":
    B, T = 2, 8  # small shapes; T == BLOCK_SIZE

    key = jax.random.PRNGKey(0)
    k_idx, k_tok, k_pos, k_w, k_b = jax.random.split(key, 5)

    # Deterministic synthetic parameters (shapes per BigramLM.__init__).
    tok_table = jax.random.normal(k_tok, (VOCAB_SIZE, N_EMBED), dtype=jnp.float32)
    pos_table = jax.random.normal(k_pos, (BLOCK_SIZE, N_EMBED), dtype=jnp.float32)
    # nn.Linear(n_embed, vocab_size): weight (V, C), bias (V,).
    w = jax.random.normal(k_w, (VOCAB_SIZE, N_EMBED), dtype=jnp.float32) * 0.1
    bias = jax.random.normal(k_b, (VOCAB_SIZE,), dtype=jnp.float32) * 0.1

    idx = jax.random.randint(k_idx, (B, T), 0, VOCAB_SIZE, dtype=jnp.int32)

    logits, loss = bigram_forward(idx, tok_table, pos_table, w, bias)
    logits = jax.block_until_ready(logits)

    # Pure-JAX reference for sanity (mirrors the PyTorch forward).
    ref = (tok_table[idx] + pos_table[jnp.arange(T)][None]) @ w.T + bias
    assert logits.shape == (B, T, VOCAB_SIZE)
    assert loss is None
    assert jnp.allclose(logits, ref, atol=1e-4, rtol=1e-4)

    print("KERNEL_OK")
</pallas_src>

<mosaic_0001>
module attributes {stable_mosaic.version = 11 : i64} {
  func.func @bigram_kernel(%arg0: i32, %arg1: memref<16x1xi32, #tpu.memory_space<vmem>>, %arg2: memref<128x32xf32, #tpu.memory_space<vmem>>, %arg3: memref<32x128xf32, #tpu.memory_space<vmem>>, %arg4: memref<16x128xf32, #tpu.memory_space<vmem>>, %arg5: memref<16x128xf32, #tpu.memory_space<vmem>>) attributes {dimension_semantics = [#tpu.dimension_semantics<parallel>], iteration_bounds = array<i64: 1>, scalar_prefetch = 0 : i64, scratch_operands = 0 : i64, tpu.core_type = #tpu.core_type<tc>, window_params = [{pipeline_mode = #tpu.pipeline_mode<synchronous>, transform_indices = @transform_0, window_bounds = array<i64: 16, 1>}, {pipeline_mode = #tpu.pipeline_mode<synchronous>, transform_indices = @transform_1, window_bounds = array<i64: 128, 32>}, {pipeline_mode = #tpu.pipeline_mode<synchronous>, transform_indices = @transform_2, window_bounds = array<i64: 32, 128>}, {pipeline_mode = #tpu.pipeline_mode<synchronous>, transform_indices = @transform_3, window_bounds = array<i64: 16, 128>}, {pipeline_mode = #tpu.pipeline_mode<synchronous>, transform_indices = @transform_4, window_bounds = array<i64: 16, 128>}]} {
    %c0 = arith.constant 0 : index
    %c0_0 = arith.constant 0 : index
    %0 = vector.load %arg1[%c0, %c0_0] : memref<16x1xi32, #tpu.memory_space<vmem>>, vector<16x1xi32>
    %1 = tpu.iota {dimensions = array<i32: 1>} : vector<16x128xi32>
    %2 = vector.broadcast %0 : vector<16x1xi32> to vector<16x128xi32>
    %3 = arith.cmpi eq, %2, %1 : vector<16x128xi32>
    %4 = arith.extui %3 : vector<16x128xi1> to vector<16x128xi32>
    %5 = arith.sitofp %4 : vector<16x128xi32> to vector<16x128xf32>
    %c0_1 = arith.constant 0 : index
    %c0_2 = arith.constant 0 : index
    %6 = vector.load %arg2[%c0_1, %c0_2] : memref<128x32xf32, #tpu.memory_space<vmem>>, vector<128x32xf32>
    %cst = arith.constant dense<0.000000e+00> : vector<16x32xf32>
    %7 = tpu.matmul %5, %6, %cst {dimension_numbers = #tpu.dot_dimension_numbers<[1], [0], [0], [1], [0, 0, 1, 1], [], []>} : vector<16x128xf32>, vector<128x32xf32>, vector<16x32xf32> -> vector<16x32xf32>
    %c0_3 = arith.constant 0 : index
    %c0_4 = arith.constant 0 : index
    %8 = vector.load %arg3[%c0_3, %c0_4] : memref<32x128xf32, #tpu.memory_space<vmem>>, vector<32x128xf32>
    %cst_5 = arith.constant dense<0.000000e+00> : vector<16x128xf32>
    %9 = tpu.matmul %7, %8, %cst_5 {dimension_numbers = #tpu.dot_dimension_numbers<[1], [0], [0], [1], [0, 0, 1, 1], [], []>} : vector<16x32xf32>, vector<32x128xf32>, vector<16x128xf32> -> vector<16x128xf32>
    %c0_6 = arith.constant 0 : index
    %c0_7 = arith.constant 0 : index
    %10 = vector.load %arg4[%c0_6, %c0_7] : memref<16x128xf32, #tpu.memory_space<vmem>>, vector<16x128xf32>
    %11 = arith.addf %9, %10 : vector<16x128xf32>
    %c0_8 = arith.constant 0 : index
    %c0_9 = arith.constant 0 : index
    %12 = vector.load %arg5[%c0_8, %c0_9] : memref<16x128xf32, #tpu.memory_space<vmem>>, vector<16x128xf32>
    tpu.vector_store %arg5[%c0_8, %c0_9], %11 {strides = array<i32>} : memref<16x128xf32, #tpu.memory_space<vmem>>, vector<16x128xf32>,
    return
  }
  func.func @transform_0(%arg0: i32) -> (i32, i32) {
    %c0_i32 = arith.constant 0 : i32
    %c0_i32_0 = arith.constant 0 : i32
    %c0_i32_1 = arith.constant 0 : i32
    return %c0_i32, %c0_i32_0 : i32, i32
  }
  func.func @transform_1(%arg0: i32) -> (i32, i32) {
    %c0_i32 = arith.constant 0 : i32
    %c0_i32_0 = arith.constant 0 : i32
    %c0_i32_1 = arith.constant 0 : i32
    return %c0_i32, %c0_i32_0 : i32, i32
  }
  func.func @transform_2(%arg0: i32) -> (i32, i32) {
    %c0_i32 = arith.constant 0 : i32
    %c0_i32_0 = arith.constant 0 : i32
    %c0_i32_1 = arith.constant 0 : i32
    return %c0_i32, %c0_i32_0 : i32, i32
  }
  func.func @transform_3(%arg0: i32) -> (i32, i32) {
    %c0_i32 = arith.constant 0 : i32
    %c0_i32_0 = arith.constant 0 : i32
    %c0_i32_1 = arith.constant 0 : i32
    return %c0_i32, %c0_i32_0 : i32, i32
  }
  func.func @transform_4(%arg0: i32) -> (i32, i32) {
    %c0_i32 = arith.constant 0 : i32
    %c0_i32_0 = arith.constant 0 : i32
    %c0_i32_1 = arith.constant 0 : i32
    return %c0_i32, %c0_i32_0 : i32, i32
  }
}

</mosaic_0001>

<llo_original>
// kernel: tpu_custom_call.1
$region0: #{tpu_custom_call.1}
  #allocation0 [shape = 'u32[]', space=smem, size = 0x4, offset = 0x4, fixed_abs, tag = 'smem constant byte address 0x4 - core index']
  #allocation1 [shape = 'u32[144,128]{1,0:T(1,128)}', space=vmem, size = 0x12000, scoped, tag = 'internal scratch']
  %s0 = inlined_call_operand.vmem [shape: s32[16,1], index: 0, kind: input, shape index: {}]
  %s1 = inlined_call_operand.vmem [shape: f32[128,32], index: 1, kind: input, shape index: {}]
  %s2 = inlined_call_operand.vmem [shape: f32[32,128], index: 2, kind: input, shape index: {}]
  %s3 = inlined_call_operand.vmem [shape: f32[16,128], index: 3, kind: input, shape index: {}]
  %s4 = inlined_call_operand.hbm [shape: f32[16,128], index: 4, kind: output, shape index: {}]
  %s5 = sld [smem:[#allocation0]]
  $region26: #{tpu_custom_call.1} parent=0
    _
  %s7 = ssub.s32 1, %s5
  %s8 = scalar_select 0, %s7, %s5
  $region1: #{tpu_custom_call.1} parent=0
    #allocation2 [shape = 'u8[8192]{0}', space=vmem, size = 0x2000, scoped, tag = 'output window, operand 0, single buffered']
    #allocation3 [shape = 's32[1]{0}', space=sflag, size = 0x4, scoped, tag = 'scoped memory for tpu_custom_call.1']
    %9 = vsyncpa [#allocation3], 0
    // Predicated region
    $region2: #{tpu_custom_call.1} parent=1 // pred_check
      _
    $region3: #{tpu_custom_call.1} parent=1 // pred_check_branch
      %11 = sbr.rel (0) target = $region5
    $region4: #{tpu_custom_call.1} parent=1 // pred_region
      _
    $region5: #{tpu_custom_call.1} parent=1 // pred_fallthru
      _
    // Predicated region
    $region6: #{tpu_custom_call.1} parent=1 // pred_check
      _
    $region7: #{tpu_custom_call.1} parent=1 // pred_check_branch
      %13 = sbr.rel (0) target = $region9
    $region8: #{tpu_custom_call.1} parent=1 // pred_region
      _
    $region9: #{tpu_custom_call.1} parent=1 // pred_fallthru
      _
    // Predicated region
    $region10: #{tpu_custom_call.1} parent=1 // pred_check
      _
    $region11: #{tpu_custom_call.1} parent=1 // pred_check_branch
      %15 = sbr.rel (0) target = $region13
    $region12: #{tpu_custom_call.1} parent=1 // pred_region
      _
    $region13: #{tpu_custom_call.1} parent=1 // pred_fallthru
      _
    // Predicated region
    $region14: #{tpu_custom_call.1} parent=1 // pred_check
      _
    $region15: #{tpu_custom_call.1} parent=1 // pred_check_branch
      %17 = sbr.rel (0) target = $region17
    $region16: #{tpu_custom_call.1} parent=1 // pred_region
      _
    $region17: #{tpu_custom_call.1} parent=1 // pred_fallthru
      _
    %v18 = vld [vmem:[%s0] sm:$0xff]
    %v19 = vld [vmem:[%s0 + $0x8] sm:$0xff]
    %v20 = vlaneseq
    %v21 = vand.u32 %v20, 127
    %22 = vset.pattern.permute.xlu0 0
    %23 = vperm.xlu0 %22, %v18
    %v24 = vpop.permute.xlu0 %23
    %25 = vset.pattern.permute.xlu0 0
    %26 = vperm.xlu0 %25, %v19
    %v27 = vpop.permute.xlu0 %26
    %vm28 = vcmp.eq.s32.totalorder %v24, %v21
    %vm29 = vcmp.eq.s32.totalorder %v27, %v21
    %v30 = vsel %vm28, 1, 0
    %v31 = vsel %vm29, 1, 0
    %v32 = vcvt.s32.f32 %v30
    %v33 = vcvt.s32.f32 %v31
    %v34 = vld [vmem:[%s1] sm:$0xff]
    %v35 = vld [vmem:[%s1 + $0x8] sm:$0xff]
    %v36 = vld [vmem:[%s1 + $0x10] sm:$0xff]
    %v37 = vld [vmem:[%s1 + $0x18] sm:$0xff]
    %v38 = vld [vmem:[%s1 + $0x20] sm:$0xff]
    %v39 = vld [vmem:[%s1 + $0x28] sm:$0xff]
    %v40 = vld [vmem:[%s1 + $0x30] sm:$0xff]
    %v41 = vld [vmem:[%s1 + $0x38] sm:$0xff]
    %v42 = vld [vmem:[%s1 + $0x40] sm:$0xff]
    %v43 = vld [vmem:[%s1 + $0x48] sm:$0xff]
    %v44 = vld [vmem:[%s1 + $0x50] sm:$0xff]
    %v45 = vld [vmem:[%s1 + $0x58] sm:$0xff]
    %v46 = vld [vmem:[%s1 + $0x60] sm:$0xff]
    %v47 = vld [vmem:[%s1 + $0x68] sm:$0xff]
    %v48 = vld [vmem:[%s1 + $0x70] sm:$0xff]
    %v49 = vld [vmem:[%s1 + $0x78] sm:$0xff]
    %50 = vmatprep.subr.mxu0 0.0
    %51 = vmatpush1.msra.mxu0 %v49
    %52 = vmatprep.subr.mxu0 0.0
    %53 = vmatpush1.msra.mxu0 %v48
    %54 = vmatprep.subr.mxu0 0.0
    %55 = vmatpush1.msra.mxu0 %v47
    %56 = vmatprep.subr.mxu0 0.0
    %57 = vmatpush1.msra.mxu0 %v46
    %58 = vmatprep.subr.mxu0 0.0
    %59 = vmatpush1.msra.mxu0 %v45
    %60 = vmatprep.subr.mxu0 0.0
    %61 = vmatpush1.msra.mxu0 %v44
    %62 = vmatprep.subr.mxu0 0.0
    %63 = vmatpush1.msra.mxu0 %v43
    %64 = vmatprep.subr.mxu0 0.0
    %65 = vmatpush1.msra.mxu0 %v42
    %66 = vmatprep.subr.mxu0 0.0
    %67 = vmatpush1.msra.mxu0 %v41
    %68 = vmatprep.subr.mxu0 0.0
    %69 = vmatpush1.msra.mxu0 %v40
    %70 = vmatprep.subr.mxu0 0.0
    %71 = vmatpush1.msra.mxu0 %v39
    %72 = vmatprep.subr.mxu0 0.0
    %73 = vmatpush1.msra.mxu0 %v38
    %74 = vmatprep.subr.mxu0 0.0
    %75 = vmatpush1.msra.mxu0 %v37
    %76 = vmatprep.subr.mxu0 0.0
    %77 = vmatpush1.msra.mxu0 %v36
    %78 = vmatprep.subr.mxu0 0.0
    %79 = vmatpush1.msra.mxu0 %v35
    %80 = vmatprep.subr.mxu0 0.0
    %81 = vmatpush1.msra.mxu0 %v34
    %82 = vmatprep.subr.mxu0 0.0
    %83 = vmatpush2.msra.mxu0 0.0
    %84 = vmatprep.subr.mxu0 0.0
    %85 = vmatpush2.msra.mxu0 0.0
    %86 = vmatprep.subr.mxu0 0.0
    %87 = vmatpush2.msra.mxu0 0.0
    %88 = vmatprep.subr.mxu0 0.0
    %89 = vmatpush2.msra.mxu0 0.0
    %90 = vmatprep.subr.mxu0 0.0
    %91 = vmatpush2.msra.mxu0 0.0
    %92 = vmatprep.subr.mxu0 0.0
    %93 = vmatpush2.msra.mxu0 0.0
    %94 = vmatprep.subr.mxu0 0.0
    %95 = vmatpush2.msra.mxu0 0.0
    %96 = vmatprep.subr.mxu0 0.0
    %97 = vmatpush2.msra.mxu0 0.0
    %98 = vmatprep.subr.mxu0 0.0
    %99 = vmatpush2.msra.mxu0 0.0
    %100 = vmatprep.subr.mxu0 0.0
    %101 = vmatpush2.msra.mxu0 0.0
    %102 = vmatprep.subr.mxu0 0.0
    %103 = vmatpush2.msra.mxu0 0.0
    %104 = vmatprep.subr.mxu0 0.0
    %105 = vmatpush2.msra.mxu0 0.0
    %106 = vmatprep.subr.mxu0 0.0
    %107 = vmatpush2.msra.mxu0 0.0
    %108 = vmatprep.subr.mxu0 0.0
    %109 = vmatpush2.msra.mxu0 0.0
    %110 = vmatprep.subr.mxu0 0.0
    %111 = vmatpush2.msra.mxu0 0.0
    %112 = vmatprep.subr.mxu0 0.0
    %113 = vmatpush2.msra.mxu0 0.0
    %114 = vmatprep.mubr.f32.mxu0 0.0
    %115 = vmatmul.mubr.f32.gmra.mxu0 %v32
    %v116 = vpop.f32.mrf.mxu0
    %v117 = vadd.f32 0.0, %v116
    %v118 = vpop.f32.mrf.mxu0
    %119 = vmatprep.mubr.f32.mxu0 0.0
    %120 = vmatmul.mubr.f32.gmra.mxu0 %v33
    %v121 = vpop.f32.mrf.mxu0
    %v122 = vadd.f32 0.0, %v121
    %v123 = vpop.f32.mrf.mxu0
    %124 = vdwg.mxu0
    %v125 = vld [vmem:[%s2] sm:$0xff]
    %v126 = vld [vmem:[%s2 + $0x8] sm:$0xff]
    %v127 = vld [vmem:[%s2 + $0x10] sm:$0xff]
    %v128 = vld [vmem:[%s2 + $0x18] sm:$0xff]
    %v129 = vld [vmem:[%s3] sm:$0xff]
    %v130 = vld [vmem:[%s3 + $0x8] sm:$0xff]
    %vm131 = vcmask 261120
    %v133 = vsel %vm131, %v117, 0
    %v136 = vsel %vm131, %v122, 0
    %138 = vmatprep.subr.mxu0 0.0
    %139 = vmatpush1.msra.mxu0 0.0
    %140 = vmatprep.subr.mxu0 0.0
    %141 = vmatpush1.msra.mxu0 0.0
    %142 = vmatprep.subr.mxu0 0.0
    %143 = vmatpush1.msra.mxu0 0.0
    %144 = vmatprep.subr.mxu0 0.0
    %145 = vmatpush1.msra.mxu0 0.0
    %146 = vmatprep.subr.mxu0 0.0
    %147 = vmatpush1.msra.mxu0 0.0
    %148 = vmatprep.subr.mxu0 0.0
    %149 = vmatpush1.msra.mxu0 0.0
    %150 = vmatprep.subr.mxu0 0.0
    %151 = vmatpush1.msra.mxu0 0.0
    %152 = vmatprep.subr.mxu0 0.0
    %153 = vmatpush1.msra.mxu0 0.0
    %154 = vmatprep.subr.mxu0 0.0
    %155 = vmatpush1.msra.mxu0 0.0
    %156 = vmatprep.subr.mxu0 0.0
    %157 = vmatpush1.msra.mxu0 0.0
    %158 = vmatprep.subr.mxu0 0.0
    %159 = vmatpush1.msra.mxu0 0.0
    %160 = vmatprep.subr.mxu0 0.0
    %161 = vmatpush1.msra.mxu0 0.0
    %162 = vmatprep.subr.mxu0 0.0
    %163 = vmatpush1.msra.mxu0 %v128
    %164 = vmatprep.subr.mxu0 0.0
    %165 = vmatpush1.msra.mxu0 %v127
    %166 = vmatprep.subr.mxu0 0.0
    %167 = vmatpush1.msra.mxu0 %v126
    %168 = vmatprep.subr.mxu0 0.0
    %169 = vmatpush1.msra.mxu0 %v125
    %170 = vmatprep.subr.mxu0 0.0
    %171 = vmatpush2.msra.mxu0 0.0
    %172 = vmatprep.subr.mxu0 0.0
    %173 = vmatpush2.msra.mxu0 0.0
    %174 = vmatprep.subr.mxu0 0.0
    %175 = vmatpush2.msra.mxu0 0.0
    %176 = vmatprep.subr.mxu0 0.0
    %177 = vmatpush2.msra.mxu0 0.0
    %178 = vmatprep.subr.mxu0 0.0
    %179 = vmatpush2.msra.mxu0 0.0
    %180 = vmatprep.subr.mxu0 0.0
    %181 = vmatpush2.msra.mxu0 0.0
    %182 = vmatprep.subr.mxu0 0.0
    %183 = vmatpush2.msra.mxu0 0.0
    %184 = vmatprep.subr.mxu0 0.0
    %185 = vmatpush2.msra.mxu0 0.0
    %186 = vmatprep.subr.mxu0 0.0
    %187 = vmatpush2.msra.mxu0 0.0
    %188 = vmatprep.subr.mxu0 0.0
    %189 = vmatpush2.msra.mxu0 0.0
    %190 = vmatprep.subr.mxu0 0.0
    %191 = vmatpush2.msra.mxu0 0.0
    %192 = vmatprep.subr.mxu0 0.0
    %193 = vmatpush2.msra.mxu0 0.0
    %194 = vmatprep.subr.mxu0 0.0
    %195 = vmatpush2.msra.mxu0 0.0
    %196 = vmatprep.subr.mxu0 0.0
    %197 = vmatpush2.msra.mxu0 0.0
    %198 = vmatprep.subr.mxu0 0.0
    %199 = vmatpush2.msra.mxu0 0.0
    %200 = vmatprep.subr.mxu0 0.0
    %201 = vmatpush2.msra.mxu0 0.0
    %202 = vmatprep.mubr.f32.mxu0 0.0
    %203 = vmatmul.mubr.f32.gmra.mxu0 %v133
    %v204 = vpop.f32.mrf.mxu0
    %v205 = vadd.f32 %v129, %v204
    %v206 = vpop.f32.mrf.mxu0
    %207 = vmatprep.mubr.f32.mxu0 0.0
    %208 = vmatmul.mubr.f32.gmra.mxu0 %v136
    %v209 = vpop.f32.mrf.mxu0
    %v210 = vadd.f32 %v130, %v209
    %v211 = vpop.f32.mrf.mxu0
    %212 = vdwg.mxu0
    %213 = vst [vmem:[#allocation2] sm:$0xff] %v205
    %214 = vst [vmem:[#allocation2 + $0x8] sm:$0xff] %v210
    // Predicated region
    $region18: #{tpu_custom_call.1} parent=1 // pred_check
      _
    $region19: #{tpu_custom_call.1} parent=1 // pred_check_branch
      %216 = sbr.rel (0) target = $region21
    $region20: #{tpu_custom_call.1} parent=1 // pred_region
      %s218 = ssub.s32 256, 256
      %219 = vsyncadd [#allocation3], %s218
      %s220 = sshll.u32 [#allocation2], 4
      %s221 = int_to_ptr.vmem [resolvable:$true] %s220
      %226 = dma.vmem_to_hbm [thread:$0]  %s221, 256, %s4, [#allocation3], 128, 128, 8
    $region21: #{tpu_custom_call.1} parent=1 // pred_fallthru
      _
    // Predicated region
    $region22: #{tpu_custom_call.1} parent=1 // pred_check
      _
    $region23: #{tpu_custom_call.1} parent=1 // pred_check_branch
      %228 = sbr.rel (0) target = $region25
    $region24: #{tpu_custom_call.1} parent=1 // pred_region
      %229 = dma.done [#allocation3], 256
    $region25: #{tpu_custom_call.1} parent=1 // pred_fallthru
      _
    %230 = vsyncpa [#allocation3], 1

</llo_original>
